<compile_context>
chip_gen: v5e
topology: v5e:2x2
jax: 0.10.0
libtpu: 0.0.40
codegen_flags: <defaults>
</compile_context>

<pallas_src>
import functools

import jax
import jax.numpy as jnp
from jax.experimental import pallas as pl
from jax.experimental.pallas import tpu as pltpu


def _reduce_logits_kernel(y_ref, opt_ref, oad_ref, out_ref, acc_ref, *,
                          late_phase, n_valid, num_classes):
    # y_ref:   (TILE_N, 1) int32 block in VMEM
    # opt_ref / oad_ref: (TILE_N, C) blocks in VMEM
    # out_ref: (3,) f32 in SMEM -> [loss_opt, loss_oad, loss_reduce]
    # acc_ref: (3,) f32 SMEM scratch, partial sums across the grid.
    step = pl.program_id(0)
    last = pl.num_programs(0) - 1

    @pl.when(step == 0)
    def _init():
        acc_ref[0] = jnp.float32(0.0)
        acc_ref[1] = jnp.float32(0.0)
        acc_ref[2] = jnp.float32(0.0)

    oad = oad_ref[...].astype(jnp.float32)
    opt = opt_ref[...].astype(jnp.float32)
    y = y_ref[...]                      # (TILE_N, 1) int32
    tile_n, c = oad.shape

    # Label mask (compare + select; no float one-hot materialization).
    cls_ids = jax.lax.broadcasted_iota(jnp.int32, (tile_n, c), 1)
    label_mask = cls_ids == y           # (TILE_N, C) bool

    # Mask rows that only exist because the final block is partial.
    row_ids = step * tile_n + jax.lax.broadcasted_iota(jnp.int32, (tile_n, 1), 0)
    row_valid = row_ids < n_valid       # (TILE_N, 1) bool

    def ce_partial_sum(logits):
        # Numerically stable log-softmax CE, summed over valid rows of this tile.
        m = jnp.max(logits, axis=-1, keepdims=True)
        lse = jnp.log(jnp.sum(jnp.exp(logits - m), axis=-1, keepdims=True)) + m
        true_logit = jnp.sum(jnp.where(label_mask, logits, 0.0),
                             axis=-1, keepdims=True)
        # jnp.where *selects*, so garbage (NaN/Inf) rows in a partial block
        # cannot contaminate the sum.
        return jnp.sum(jnp.where(row_valid, lse - true_logit, 0.0))

    # CE(oad) is needed in both phases.
    acc_ref[1] += ce_partial_sum(oad)

    if not late_phase:
        # Early phase: also CE(opt); sigmoid/diff^2 pass eliminated at trace time.
        acc_ref[0] += ce_partial_sum(opt)
    else:
        # Late phase: reduce loss; CE(opt) eliminated at trace time.
        diff = jax.nn.sigmoid(opt) - jax.nn.sigmoid(oad)
        acc_ref[2] += jnp.sum(jnp.where(row_valid, diff * diff, 0.0))

    @pl.when(step == last)
    def _finalize():
        inv_n = jnp.float32(1.0 / float(n_valid))
        inv_nc = jnp.float32(1.0 / (float(n_valid) * float(num_classes)))
        out_ref[0] = acc_ref[0] * inv_n
        out_ref[1] = acc_ref[1] * inv_n
        out_ref[2] = acc_ref[2] * inv_nc


def _pick_tile_n(n, c):
    # VMEM footprint of a (tile_n, c) f32 block is lane-padded to ceil(c/128)*128
    # lanes.  Budget ~6 MiB for the 2 logits inputs x 2 pipeline buffers plus the
    # label blocks, keep tile_n a multiple of 8 (sublane), and large enough to
    # amortize the ~0.35us/grid-step overhead.  Conservative for v5e's 16 MiB
    # scoped-VMEM default and v7x's 64 MiB physical VMEM.
    c_pad = ((max(c, 1) + 127) // 128) * 128
    per_row_bytes = 16 * c_pad + 1024        # 2 inputs * 2 bufs * 4B + label blocks
    budget_bytes = 6 * 1024 * 1024
    t = budget_bytes // per_row_bytes
    t = max(8, min(4096, (t // 8) * 8))
    if t >= n:
        return n                             # single full-extent block
    return t


def _pallas_losses(logits_opt, logits_oad, y, late_phase):
    n, c = logits_opt.shape
    tile_n = _pick_tile_n(n, c)
    num_tiles = pl.cdiv(n, tile_n)           # partial final block handled in-kernel
    y2d = y.astype(jnp.int32).reshape(n, 1)

    kernel = functools.partial(_reduce_logits_kernel,
                               late_phase=bool(late_phase),
                               n_valid=n, num_classes=c)

    # TODO(synk): on v7x, split the batch grid across the two TensorCores
    # (leading "parallel" axis + per-core partial sums) for very large N.
    # TODO(synk): for lane density, producers should prefer C as a multiple of
    # 128; the kernel is correct for any C (full-array last dim).
    return pl.pallas_call(
        kernel,
        out_shape=jax.ShapeDtypeStruct((3,), jnp.float32),
        grid_spec=pltpu.PrefetchScalarGridSpec(
            num_scalar_prefetch=0,
            grid=(num_tiles,),
            in_specs=[
                pl.BlockSpec((tile_n, 1), lambda i: (i, 0)),  # y
                pl.BlockSpec((tile_n, c), lambda i: (i, 0)),  # logits_opt
                pl.BlockSpec((tile_n, c), lambda i: (i, 0)),  # logits_oad
            ],
            out_specs=pl.BlockSpec(memory_space=pltpu.MemorySpace.SMEM),
            scratch_shapes=[pltpu.SMEM((3,), jnp.float32)],
        ),
        compiler_params=pltpu.CompilerParams(
            dimension_semantics=("arbitrary",),
            vmem_limit_bytes=32 * 1024 * 1024),
    )(y2d, logits_opt, logits_oad)


class DLLReduceLogits:
    """JAX/Pallas equivalent of DLL_ReduceLogits (no learnable parameters)."""

    def __init__(self, n_change_loss=100):
        self.n_change_loss = n_change_loss
        self._n_change_loss_current = 0

    def __call__(self, logits, y):
        logits_opt, logits_oad = logits
        late = self._n_change_loss_current >= self.n_change_loss
        losses = _pallas_losses(logits_opt, logits_oad, y, late)
        if late:
            return losses[1] + losses[2]
        else:
            return (losses[0], losses[1])


def _ref_losses(logits_opt, logits_oad, y):
    lo = logits_opt.astype(jnp.float32)
    la = logits_oad.astype(jnp.float32)

    def ce(logits):
        lse = jax.scipy.special.logsumexp(logits, axis=-1)
        tl = jnp.take_along_axis(logits, y[:, None].astype(jnp.int32), axis=-1)[:, 0]
        return jnp.mean(lse - tl)

    diff = jax.nn.sigmoid(lo) - jax.nn.sigmoid(la)
    return ce(lo), ce(la), jnp.mean(diff * diff)


if __name__ == "__main__":
    key = jax.random.PRNGKey(0)
    k1, k2, k3 = jax.random.split(key, 3)

    # Small shapes consistent with the module's forward: (batch, num_classes).
    N, C = 8, 16
    logits_opt = jax.random.normal(k1, (N, C), dtype=jnp.float32)
    logits_oad = jax.random.normal(k2, (N, C), dtype=jnp.float32)
    y = jax.random.randint(k3, (N,), 0, C, dtype=jnp.int32)

    module = DLLReduceLogits(n_change_loss=100)

    # Early-training branch: returns (loss_opt, loss_oad).
    loss_opt, loss_oad = module((logits_opt, logits_oad), y)
    jax.block_until_ready(loss_opt)
    jax.block_until_ready(loss_oad)

    # Late-training branch: returns loss_oad + mean((sigmoid diff)^2).
    module._n_change_loss_current = module.n_change_loss
    combined = module((logits_opt, logits_oad), y)
    jax.block_until_ready(combined)

    # Reference check (plain jnp).
    ref_opt, ref_oad, ref_red = _ref_losses(logits_opt, logits_oad, y)
    assert abs(float(loss_opt) - float(ref_opt)) < 1e-4
    assert abs(float(loss_oad) - float(ref_oad)) < 1e-4
    assert abs(float(combined) - float(ref_oad + ref_red)) < 1e-4

    # Exercise the multi-tile grid + partial-final-block path on a medium batch.
    N2 = 5000
    k4, k5, k6 = jax.random.split(jax.random.PRNGKey(1), 3)
    lo2 = jax.random.normal(k4, (N2, C), dtype=jnp.float32)
    la2 = jax.random.normal(k5, (N2, C), dtype=jnp.float32)
    y2 = jax.random.randint(k6, (N2,), 0, C, dtype=jnp.int32)
    r_opt2, r_oad2, r_red2 = _ref_losses(lo2, la2, y2)

    m_early = DLLReduceLogits(n_change_loss=100)   # early phase
    lo_opt2, lo_oad2 = m_early((lo2, la2), y2)
    jax.block_until_ready(lo_oad2)
    assert abs(float(lo_opt2) - float(r_opt2)) < 2e-3
    assert abs(float(lo_oad2) - float(r_oad2)) < 2e-3

    m_late = DLLReduceLogits(n_change_loss=0)      # late phase immediately
    combined2 = m_late((lo2, la2), y2)
    jax.block_until_ready(combined2)
    assert abs(float(combined2) - float(r_oad2 + r_red2)) < 2e-3

    print("KERNEL_OK")
</pallas_src>

<mosaic_0001>
module attributes {stable_mosaic.version = 11 : i64} {
  func.func @_reduce_logits_kernel(%arg0: i32, %arg1: memref<8x1xi32, #tpu.memory_space<vmem>>, %arg2: memref<8x16xf32, #tpu.memory_space<vmem>>, %arg3: memref<8x16xf32, #tpu.memory_space<vmem>>, %arg4: memref<3xf32, #tpu.memory_space<smem>>, %arg5: memref<3xf32, #tpu.memory_space<smem>>) attributes {dimension_semantics = [#tpu.dimension_semantics<arbitrary>], iteration_bounds = array<i64: 1>, scalar_prefetch = 0 : i64, scratch_operands = 1 : i64, tpu.core_type = #tpu.core_type<tc>, window_params = [{transform_indices = @transform_0, window_bounds = array<i64: 8, 1>}, {transform_indices = @transform_1, window_bounds = array<i64: 8, 16>}, {transform_indices = @transform_2, window_bounds = array<i64: 8, 16>}, {transform_indices = @transform_3, window_bounds = array<i64: 3>}]} {
    %c0_i32 = arith.constant 0 : i32
    %0 = arith.cmpi eq, %arg0, %c0_i32 : i32
    %1 = arith.extui %0 : i1 to i32
    %c0_i32_0 = arith.constant 0 : i32
    %2 = arith.cmpi ne, %1, %c0_i32_0 : i32
    scf.if %2 {
      %cst_23 = arith.constant 0.000000e+00 : f32
      %c0_24 = arith.constant 0 : index
      %64 = memref.load %arg5[%c0_24] : memref<3xf32, #tpu.memory_space<smem>>
      memref.store %cst_23, %arg5[%c0_24] : memref<3xf32, #tpu.memory_space<smem>>
      %cst_25 = arith.constant 0.000000e+00 : f32
      %c1_26 = arith.constant 1 : index
      %65 = memref.load %arg5[%c1_26] : memref<3xf32, #tpu.memory_space<smem>>
      memref.store %cst_25, %arg5[%c1_26] : memref<3xf32, #tpu.memory_space<smem>>
      %cst_27 = arith.constant 0.000000e+00 : f32
      %c2 = arith.constant 2 : index
      %66 = memref.load %arg5[%c2] : memref<3xf32, #tpu.memory_space<smem>>
      memref.store %cst_27, %arg5[%c2] : memref<3xf32, #tpu.memory_space<smem>>
    } else {
    }
    %c0 = arith.constant 0 : index
    %c0_1 = arith.constant 0 : index
    %3 = vector.load %arg3[%c0, %c0_1] : memref<8x16xf32, #tpu.memory_space<vmem>>, vector<8x16xf32>
    %c0_2 = arith.constant 0 : index
    %c0_3 = arith.constant 0 : index
    %4 = vector.load %arg2[%c0_2, %c0_3] : memref<8x16xf32, #tpu.memory_space<vmem>>, vector<8x16xf32>
    %c0_4 = arith.constant 0 : index
    %c0_5 = arith.constant 0 : index
    %5 = vector.load %arg1[%c0_4, %c0_5] : memref<8x1xi32, #tpu.memory_space<vmem>>, vector<8x1xi32>
    %6 = tpu.iota {dimensions = array<i32: 1>} : vector<8x16xi32>
    %7 = vector.broadcast %5 : vector<8x1xi32> to vector<8x16xi32>
    %8 = arith.cmpi eq, %6, %7 : vector<8x16xi32>
    %c8_i32 = arith.constant 8 : i32
    %9 = arith.muli %arg0, %c8_i32 : i32
    %10 = tpu.iota {dimensions = array<i32: 0>} : vector<8x1xi32>
    %11 = vector.broadcast %9 : i32 to vector<8x1xi32>
    %12 = arith.addi %11, %10 : vector<8x1xi32>
    %c8_i32_6 = arith.constant 8 : i32
    %13 = vector.broadcast %c8_i32_6 : i32 to vector<8x1xi32>
    %14 = arith.cmpi slt, %12, %13 : vector<8x1xi32>
    %c1 = arith.constant 1 : index
    %15 = memref.load %arg5[%c1] : memref<3xf32, #tpu.memory_space<smem>>
    %cst = arith.constant dense<0xFF800000> : vector<8xf32>
    %16 = vector.multi_reduction <maximumf>, %3, %cst [1] : vector<8x16xf32> to vector<8xf32>
    %17 = vector.shape_cast %16 : vector<8xf32> to vector<8x1xf32>
    %18 = vector.broadcast %17 : vector<8x1xf32> to vector<8x16xf32>
    %19 = arith.subf %3, %18 : vector<8x16xf32>
    %20 = math.exp %19 : vector<8x16xf32>
    %cst_7 = arith.constant dense<0.000000e+00> : vector<8xf32>
    %21 = vector.multi_reduction <add>, %20, %cst_7 [1] : vector<8x16xf32> to vector<8xf32>
    %22 = vector.shape_cast %21 : vector<8xf32> to vector<8x1xf32>
    %23 = math.log %22 : vector<8x1xf32>
    %24 = arith.addf %23, %17 : vector<8x1xf32>
    %cst_8 = arith.constant 0.000000e+00 : f32
    %25 = vector.broadcast %cst_8 : f32 to vector<8x16xf32>
    %26 = arith.select %8, %3, %25 : vector<8x16xi1>, vector<8x16xf32>
    %cst_9 = arith.constant dense<0.000000e+00> : vector<8xf32>
    %27 = vector.multi_reduction <add>, %26, %cst_9 [1] : vector<8x16xf32> to vector<8xf32>
    %28 = vector.shape_cast %27 : vector<8xf32> to vector<8x1xf32>
    %29 = arith.subf %24, %28 : vector<8x1xf32>
    %cst_10 = arith.constant 0.000000e+00 : f32
    %30 = vector.broadcast %cst_10 : f32 to vector<8x1xf32>
    %31 = arith.select %14, %29, %30 : vector<8x1xi1>, vector<8x1xf32>
    %32 = vector.shape_cast %31 : vector<8x1xf32> to vector<1x8x1xf32>
    %cst_11 = arith.constant dense<0.000000e+00> : vector<1xf32>
    %33 = vector.multi_reduction <add>, %32, %cst_11 [1, 2] : vector<1x8x1xf32> to vector<1xf32>
    %34 = vector.shape_cast %33 : vector<1xf32> to vector<1x1x1xf32>
    %35 = vector.extract %34[0, 0, 0] : f32 from vector<1x1x1xf32>
    %36 = arith.addf %15, %35 : f32
    %c1_12 = arith.constant 1 : index
    %37 = memref.load %arg5[%c1_12] : memref<3xf32, #tpu.memory_space<smem>>
    memref.store %36, %arg5[%c1_12] : memref<3xf32, #tpu.memory_space<smem>>
    %c0_13 = arith.constant 0 : index
    %38 = memref.load %arg5[%c0_13] : memref<3xf32, #tpu.memory_space<smem>>
    %cst_14 = arith.constant dense<0xFF800000> : vector<8xf32>
    %39 = vector.multi_reduction <maximumf>, %4, %cst_14 [1] : vector<8x16xf32> to vector<8xf32>
    %40 = vector.shape_cast %39 : vector<8xf32> to vector<8x1xf32>
    %41 = vector.broadcast %40 : vector<8x1xf32> to vector<8x16xf32>
    %42 = arith.subf %4, %41 : vector<8x16xf32>
    %43 = math.exp %42 : vector<8x16xf32>
    %cst_15 = arith.constant dense<0.000000e+00> : vector<8xf32>
    %44 = vector.multi_reduction <add>, %43, %cst_15 [1] : vector<8x16xf32> to vector<8xf32>
    %45 = vector.shape_cast %44 : vector<8xf32> to vector<8x1xf32>
    %46 = math.log %45 : vector<8x1xf32>
    %47 = arith.addf %46, %40 : vector<8x1xf32>
    %cst_16 = arith.constant 0.000000e+00 : f32
    %48 = vector.broadcast %cst_16 : f32 to vector<8x16xf32>
    %49 = arith.select %8, %4, %48 : vector<8x16xi1>, vector<8x16xf32>
    %cst_17 = arith.constant dense<0.000000e+00> : vector<8xf32>
    %50 = vector.multi_reduction <add>, %49, %cst_17 [1] : vector<8x16xf32> to vector<8xf32>
    %51 = vector.shape_cast %50 : vector<8xf32> to vector<8x1xf32>
    %52 = arith.subf %47, %51 : vector<8x1xf32>
    %cst_18 = arith.constant 0.000000e+00 : f32
    %53 = vector.broadcast %cst_18 : f32 to vector<8x1xf32>
    %54 = arith.select %14, %52, %53 : vector<8x1xi1>, vector<8x1xf32>
    %55 = vector.shape_cast %54 : vector<8x1xf32> to vector<1x8x1xf32>
    %cst_19 = arith.constant dense<0.000000e+00> : vector<1xf32>
    %56 = vector.multi_reduction <add>, %55, %cst_19 [1, 2] : vector<1x8x1xf32> to vector<1xf32>
    %57 = vector.shape_cast %56 : vector<1xf32> to vector<1x1x1xf32>
    %58 = vector.extract %57[0, 0, 0] : f32 from vector<1x1x1xf32>
    %59 = arith.addf %38, %58 : f32
    %c0_20 = arith.constant 0 : index
    %60 = memref.load %arg5[%c0_20] : memref<3xf32, #tpu.memory_space<smem>>
    memref.store %59, %arg5[%c0_20] : memref<3xf32, #tpu.memory_space<smem>>
    %c0_i32_21 = arith.constant 0 : i32
    %61 = arith.cmpi eq, %arg0, %c0_i32_21 : i32
    %62 = arith.extui %61 : i1 to i32
    %c0_i32_22 = arith.constant 0 : i32
    %63 = arith.cmpi ne, %62, %c0_i32_22 : i32
    scf.if %63 {
      %c0_23 = arith.constant 0 : index
      %64 = memref.load %arg5[%c0_23] : memref<3xf32, #tpu.memory_space<smem>>
      %cst_24 = arith.constant 1.250000e-01 : f32
      %65 = arith.mulf %64, %cst_24 : f32
      %c0_25 = arith.constant 0 : index
      %66 = memref.load %arg4[%c0_25] : memref<3xf32, #tpu.memory_space<smem>>
      memref.store %65, %arg4[%c0_25] : memref<3xf32, #tpu.memory_space<smem>>
      %c1_26 = arith.constant 1 : index
      %67 = memref.load %arg5[%c1_26] : memref<3xf32, #tpu.memory_space<smem>>
      %cst_27 = arith.constant 1.250000e-01 : f32
      %68 = arith.mulf %67, %cst_27 : f32
      %c1_28 = arith.constant 1 : index
      %69 = memref.load %arg4[%c1_28] : memref<3xf32, #tpu.memory_space<smem>>
      memref.store %68, %arg4[%c1_28] : memref<3xf32, #tpu.memory_space<smem>>
      %c2 = arith.constant 2 : index
      %70 = memref.load %arg5[%c2] : memref<3xf32, #tpu.memory_space<smem>>
      %cst_29 = arith.constant 7.812500e-03 : f32
      %71 = arith.mulf %70, %cst_29 : f32
      %c2_30 = arith.constant 2 : index
      %72 = memref.load %arg4[%c2_30] : memref<3xf32, #tpu.memory_space<smem>>
      memref.store %71, %arg4[%c2_30] : memref<3xf32, #tpu.memory_space<smem>>
    } else {
    }
    return
  }
  func.func @transform_0(%arg0: i32) -> (i32, i32) {
    %c0_i32 = arith.constant 0 : i32
    %c0_i32_0 = arith.constant 0 : i32
    return %arg0, %c0_i32 : i32, i32
  }
  func.func @transform_1(%arg0: i32) -> (i32, i32) {
    %c0_i32 = arith.constant 0 : i32
    %c0_i32_0 = arith.constant 0 : i32
    return %arg0, %c0_i32 : i32, i32
  }
  func.func @transform_2(%arg0: i32) -> (i32, i32) {
    %c0_i32 = arith.constant 0 : i32
    %c0_i32_0 = arith.constant 0 : i32
    return %arg0, %c0_i32 : i32, i32
  }
  func.func @transform_3(%arg0: i32) -> i32 {
    %c0_i32 = arith.constant 0 : i32
    %c0_i32_0 = arith.constant 0 : i32
    return %c0_i32 : i32
  }
}

</mosaic_0001>

<llo_original>
// kernel: tpu_custom_call.1
$region0: #{tpu_custom_call.1}
  #allocation0 [shape = 'u32[]', space=smem, size = 0x4, offset = 0x4, fixed_abs, tag = 'smem constant byte address 0x4 - core index']
  #allocation1 [shape = 'u32[72,128]{1,0:T(1,128)}', space=vmem, size = 0x9000, scoped, tag = 'internal scratch']
  #allocation2 [shape = 'f32[3]{0:T(128)}', space=smem, size = 0x200, scoped, tag = 'scratch operand']
  %s0 = inlined_call_operand.vmem [shape: s32[8,1], index: 0, kind: input, shape index: {}]
  %s1 = inlined_call_operand.vmem [shape: f32[8,16], index: 1, kind: input, shape index: {}]
  %s2 = inlined_call_operand.hbm [shape: f32[8,16], index: 2, kind: input, shape index: {}]
  %s3 = inlined_call_operand.hbm [shape: f32[3], index: 3, kind: output, shape index: {}]
  %s4 = sld [smem:[#allocation0]]
  $region34: #{tpu_custom_call.1} parent=0
    _
  %s6 = ssub.s32 1, %s4
  %s7 = scalar_select 0, %s6, %s4
  $region1: #{tpu_custom_call.1} parent=0
    #allocation3 [shape = 'u8[4096]{0}', space=vmem, size = 0x1000, scoped, tag = 'input window, operand 2, single buffered']
    #allocation4 [shape = 's32[1]{0}', space=sflag, size = 0x4, scoped, tag = 'scoped memory for tpu_custom_call.1']
    #allocation5 [shape = 's32[1]{0}', space=sflag, size = 0x4, scoped, tag = 'scoped memory for tpu_custom_call.1']
    #allocation6 [shape = 'u8[512]{0}', space=smem, size = 0x200, scoped, tag = 'output window, operand 0, single buffered']
    %8 = vsyncpa [#allocation4], 0
    %9 = vsyncpa [#allocation5], 0
    // Predicated region
    $region2: #{tpu_custom_call.1} parent=1 // pred_check
      _
    $region3: #{tpu_custom_call.1} parent=1 // pred_check_branch
      %11 = sbr.rel (0) target = $region5
    $region4: #{tpu_custom_call.1} parent=1 // pred_region
      _
    $region5: #{tpu_custom_call.1} parent=1 // pred_fallthru
      _
    // Predicated region
    $region6: #{tpu_custom_call.1} parent=1 // pred_check
      _
    $region7: #{tpu_custom_call.1} parent=1 // pred_check_branch
      %13 = sbr.rel (0) target = $region9
    $region8: #{tpu_custom_call.1} parent=1 // pred_region
      _
    $region9: #{tpu_custom_call.1} parent=1 // pred_fallthru
      _
    // Predicated region
    $region10: #{tpu_custom_call.1} parent=1 // pred_check
      _
    $region11: #{tpu_custom_call.1} parent=1 // pred_check_branch
      %15 = sbr.rel (0) target = $region13
    $region12: #{tpu_custom_call.1} parent=1 // pred_region
      %17 = vsyncadd [#allocation4], 0
      %s19 = sshll.u32 %s2, 4
      %s20 = int_to_ptr.hbm [resolvable:$true] %s19
      %s21 = sshll.u32 [#allocation3], 4
      %s22 = int_to_ptr.vmem [resolvable:$true] %s21
      %24 = dma.hbm_to_vmem [thread:$0]  %s20, 128, %s22, [#allocation4]
    $region13: #{tpu_custom_call.1} parent=1 // pred_fallthru
      _
    // Predicated region
    $region14: #{tpu_custom_call.1} parent=1 // pred_check
      _
    $region15: #{tpu_custom_call.1} parent=1 // pred_check_branch
      %26 = sbr.rel (0) target = $region17
    $region16: #{tpu_custom_call.1} parent=1 // pred_region
      %28 = dma.done [#allocation4], 128
    $region17: #{tpu_custom_call.1} parent=1 // pred_fallthru
      _
    %p29 = scmp.eq.s32.totalorder 0, 0
    // Predicated region
    $region18: #{tpu_custom_call.1} parent=1 // pred_check
      %p30 = pneg %p29
    $region19: #{tpu_custom_call.1} parent=1 // pred_check_branch
      %32 = sbr.rel (%p30) target = $region21
    $region20: #{tpu_custom_call.1} parent=1 // pred_region
      %s33 = scalar_lea.smem [#allocation2], 0
      %34 = sst [smem:[%s33]] 0.0
      %s35 = scalar_lea.smem [#allocation2], 1
      %36 = sst [smem:[%s35]] 0.0
      %s37 = scalar_lea.smem [#allocation2], 2
      %38 = sst [smem:[%s37]] 0.0
    $region21: #{tpu_custom_call.1} parent=1 // pred_fallthru
      _
    %v39 = vld [vmem:[#allocation3] sm:$0xff]
    %v40 = vld [vmem:[%s1] sm:$0xff]
    %v41 = vld [vmem:[%s0] sm:$0xff]
    %v42 = vlaneseq
    %v43 = vand.u32 %v42, 127
    %44 = vset.pattern.permute.xlu0 0
    %45 = vperm.xlu0 %44, %v41
    %v46 = vpop.permute.xlu0 %45
    %vm47 = vcmp.eq.s32.totalorder %v43, %v46
    %s48 = smul.u32 0, 8
    %v49 = vlaneseq
    %v50 = vshrl.u32 %v49, 7
    %v51 = vstv %s48
    %v52 = vadd.s32 %v51, %v50
    %vm53 = vcmp.lt.s32.totalorder %v52, 8
    %s54 = sld [smem:[#allocation2 + $0x1]]
    %vm55 = vcmask 130048
    %v56 = vsel %vm55, %v39, -inf
    %57 = vmax.xlane.f32.xlu0 %v56
    %v58 = vpop.xlane.xlu0 %57
    %v59 = vsub.f32 %v39, %v58
    %v60 = vmul.f32 %v59, 1.442695
    %v61 = vpow.pop %v60
    %v62 = vsel %vm55, %v61, 0.0
    %63 = vadd.xlane.f32.xlu0 %v62
    %v64 = vpop.xlane.xlu0 %63
    %v65 = vlog2.pop %v64
    %v66 = vmul.f32 %v65, 0.6931472
    %v67 = vadd.f32 %v66, %v58
    %v68 = vsel %vm47, %v39, 0.0
    %v69 = vsel %vm55, %v68, 0.0
    %70 = vadd.xlane.f32.xlu0 %v69
    %v71 = vpop.xlane.xlu0 %70
    %v72 = vsub.f32 %v67, %v71
    %v73 = vsel %vm53, %v72, 0.0
    %vm74 = vcmask 7168
    %v75 = vsel %vm74, %v73, 0.0
    %76 = vadd.xlane.f32.xlu0 %v75
    %v77 = vpop.xlane.xlu0 %76
    %v78 = vrot.slane %v77, 4
    %v79 = vadd.f32 %v77, %v78
    %v80 = vrot.slane %v79, 2
    %v81 = vadd.f32 %v79, %v80
    %v82 = vrot.slane %v81, 1
    %v83 = vadd.f32 %v81, %v82
    %s84 = vtos %v83
    %s85 = sadd.f32 %s54, %s84
    %s86 = scalar_lea.smem [#allocation2], 1
    %87 = sst [smem:[%s86]] %s85
    %s88 = sld [smem:[#allocation2]]
    %v89 = vsel %vm55, %v40, -inf
    %90 = vmax.xlane.f32.xlu0 %v89
    %v91 = vpop.xlane.xlu0 %90
    %v92 = vsub.f32 %v40, %v91
    %v93 = vmul.f32 %v92, 1.442695
    %v94 = vpow.pop %v93
    %v95 = vsel %vm55, %v94, 0.0
    %96 = vadd.xlane.f32.xlu0 %v95
    %v97 = vpop.xlane.xlu0 %96
    %v98 = vlog2.pop %v97
    %v99 = vmul.f32 %v98, 0.6931472
    %v100 = vadd.f32 %v99, %v91
    %v101 = vsel %vm47, %v40, 0.0
    %v102 = vsel %vm55, %v101, 0.0
    %103 = vadd.xlane.f32.xlu0 %v102
    %v104 = vpop.xlane.xlu0 %103
    %v105 = vsub.f32 %v100, %v104
    %v106 = vsel %vm53, %v105, 0.0
    %v107 = vsel %vm74, %v106, 0.0
    %108 = vadd.xlane.f32.xlu0 %v107
    %v109 = vpop.xlane.xlu0 %108
    %v110 = vrot.slane %v109, 4
    %v111 = vadd.f32 %v109, %v110
    %v112 = vrot.slane %v111, 2
    %v113 = vadd.f32 %v111, %v112
    %v114 = vrot.slane %v113, 1
    %v115 = vadd.f32 %v113, %v114
    %s116 = vtos %v115
    %s117 = sadd.f32 %s88, %s116
    %s118 = scalar_lea.smem [#allocation2], 0
    %119 = sst [smem:[%s118]] %s117
    // Predicated region
    $region22: #{tpu_custom_call.1} parent=1 // pred_check
      %p120 = pneg %p29
    $region23: #{tpu_custom_call.1} parent=1 // pred_check_branch
      %122 = sbr.rel (%p120) target = $region25
    $region24: #{tpu_custom_call.1} parent=1 // pred_region
      %s123 = sld [smem:[#allocation2]]
      %s124 = smul.f32 %s123, 0.125
      %s125 = scalar_lea.smem [#allocation6], 0
      %126 = sst [smem:[%s125]] %s124
      %s127 = sld [smem:[#allocation2 + $0x1]]
      %s128 = smul.f32 %s127, 0.125
      %s129 = scalar_lea.smem [#allocation6], 1
      %130 = sst [smem:[%s129]] %s128
      %s131 = sld [smem:[#allocation2 + $0x2]]
      %s132 = smul.f32 %s131, 0.0078125
      %s133 = scalar_lea.smem [#allocation6], 2
      %134 = sst [smem:[%s133]] %s132
    $region25: #{tpu_custom_call.1} parent=1 // pred_fallthru
      _
    // Predicated region
    $region26: #{tpu_custom_call.1} parent=1 // pred_check
      _
    $region27: #{tpu_custom_call.1} parent=1 // pred_check_branch
      %136 = sbr.rel (0) target = $region29
    $region28: #{tpu_custom_call.1} parent=1 // pred_region
      %138 = vsyncadd [#allocation5], 0
      %s140 = sshll.u32 %s3, 4
      %s141 = int_to_ptr.hbm [resolvable:$true] %s140
      %143 = dma.smem_to_hbm [#allocation6], 16, %s141, [#allocation5]
    $region29: #{tpu_custom_call.1} parent=1 // pred_fallthru
      _
    // Predicated region
    $region30: #{tpu_custom_call.1} parent=1 // pred_check
      _
    $region31: #{tpu_custom_call.1} parent=1 // pred_check_branch
      %145 = sbr.rel (0) target = $region33
    $region32: #{tpu_custom_call.1} parent=1 // pred_region
      %147 = dma.done [#allocation5], 16
    $region33: #{tpu_custom_call.1} parent=1 // pred_fallthru
      _
    %148 = sfence
    %149 = vsyncpa [#allocation4], 1
    %150 = vsyncpa [#allocation5], 1

</llo_original>
